<compile_context>
chip_gen: v6e
topology: v6e:2x2x1
jax: 0.10.0
libtpu: 0.0.40
codegen_flags: <defaults>
</compile_context>

<pallas_src>
import jax
import jax.numpy as jnp
from jax.experimental import pallas as pl
from jax.experimental.pallas import tpu as pltpu

KSIZE = 7
STRIDE = 2
PAD = 3
CIN = 3
COUT = 64
K = KSIZE * KSIZE * CIN          # 147 (not padded in HBM)
BN_EPS = 1e-5
TM_DEFAULT = 1024                # output-pixel (lane) tile size; small enough for v5e/v6e/v7x VMEM


def _round_up(x, m):
    return ((x + m - 1) // m) * m


def _stats_kernel(p_ref, w_ref, sum_ref, sumsq_ref):
    """Pass 1: accumulate per-channel sum / sum-of-squares of the conv output across the M grid."""
    @pl.when(pl.program_id(0) == 0)
    def _():
        sum_ref[...] = jnp.zeros_like(sum_ref)
        sumsq_ref[...] = jnp.zeros_like(sumsq_ref)

    # (COUT, K) @ (K, TM) -> (COUT, TM); bf16 operands, f32 accumulation on the MXU.
    y = jnp.dot(w_ref[...], p_ref[...], preferred_element_type=jnp.float32)
    sum_ref[...] += jnp.sum(y, axis=1, keepdims=True)
    sumsq_ref[...] += jnp.sum(y * y, axis=1, keepdims=True)


def _norm_kernel(p_ref, w_ref, scale_ref, shift_ref, o_ref):
    """Pass 2: recompute conv tile, apply folded BN (scale, shift) + ReLU; lane-dense (COUT, TM) store."""
    y = jnp.dot(w_ref[...], p_ref[...], preferred_element_type=jnp.float32)
    o_ref[...] = jnp.maximum(y * scale_ref[...] + shift_ref[...], 0.0)


def _im2col_kmajor(x_nchw):
    """NCHW -> K-major patches (K, M); k ordered (kh, kw, cin), m ordered (n, ho, wo)."""
    n, c, h, w = x_nchw.shape
    x = jnp.transpose(x_nchw, (0, 2, 3, 1))                      # NHWC
    xp = jnp.pad(x, ((0, 0), (PAD, PAD), (PAD, PAD), (0, 0)))
    ho = (h + 2 * PAD - KSIZE) // STRIDE + 1
    wo = (w + 2 * PAD - KSIZE) // STRIDE + 1
    cols = []
    for i in range(KSIZE):
        for j in range(KSIZE):
            cols.append(xp[:, i:i + STRIDE * ho:STRIDE, j:j + STRIDE * wo:STRIDE, :])
    p = jnp.stack(cols, axis=0)                                  # (kh*kw, N, Ho, Wo, Cin)
    p = jnp.transpose(p, (0, 4, 1, 2, 3))                        # (kh*kw, Cin, N, Ho, Wo)
    return p.reshape(KSIZE * KSIZE * c, n * ho * wo), ho, wo


def firstlayer_forward(x, conv_w, conv_b, bn_gamma, bn_beta, *, tile_m=TM_DEFAULT):
    """x: (N, 3, H, W) f32 -> (N, 64, Ho, Wo) f32 (training-mode BN statistics)."""
    del conv_b  # cancels exactly under training-mode BatchNorm (batch-mean subtraction)
    n = x.shape[0]

    patches, ho, wo = _im2col_kmajor(x)                          # (147, M)
    m = patches.shape[1]

    tm = min(tile_m, _round_up(m, 128))                          # lane-dense tile, multiple of 128
    m_pad = _round_up(m, tm)
    # Zero padding along M contributes 0 to sum/sumsq; mean/var divide by the real M below.
    patches = jnp.pad(patches, ((0, 0), (0, m_pad - m))).astype(jnp.bfloat16)
    w_t = jnp.transpose(conv_w, (0, 2, 3, 1)).reshape(COUT, K).astype(jnp.bfloat16)
    n_tiles = m_pad // tm

    p_spec = pl.BlockSpec((K, tm), lambda i: (0, i))             # K == full array dim (no HBM pad)
    w_spec = pl.BlockSpec((COUT, K), lambda i: (0, 0))           # resident
    vec_spec = pl.BlockSpec((COUT, 1), lambda i: (0, 0))         # resident per-channel vectors

    flops = 2 * COUT * K * m_pad
    p_bytes = K * m_pad * 2
    w_bytes = COUT * K * 2

    # ---- pass 1: per-channel sum / sumsq over all M (cross-tile accumulation) ----
    ch_sum, ch_sumsq = pl.pallas_call(
        _stats_kernel,
        grid=(n_tiles,),
        in_specs=[p_spec, w_spec],
        out_specs=(vec_spec, vec_spec),
        out_shape=(jax.ShapeDtypeStruct((COUT, 1), jnp.float32),
                   jax.ShapeDtypeStruct((COUT, 1), jnp.float32)),
        compiler_params=pltpu.CompilerParams(
            dimension_semantics=("arbitrary",),                  # reduction across the M grid
            vmem_limit_bytes=32 * 1024 * 1024),
        cost_estimate=pl.CostEstimate(flops=flops, transcendentals=0,
                                      bytes_accessed=p_bytes + w_bytes + 2 * COUT * 4),
    )(patches, w_t)

    # ---- fold BN into per-channel (scale, shift); tiny (64 channels), stays in plain JAX ----
    count = jnp.float32(m)
    mu = ch_sum / count
    var = jnp.maximum(ch_sumsq / count - mu * mu, 0.0)           # keep f32; clamp tiny negatives
    scale = bn_gamma.reshape(COUT, 1).astype(jnp.float32) * jax.lax.rsqrt(var + BN_EPS)
    shift = bn_beta.reshape(COUT, 1).astype(jnp.float32) - mu * scale

    # ---- pass 2: recompute conv tile, apply scale/shift + ReLU, channel-major output ----
    out_km = pl.pallas_call(
        _norm_kernel,
        grid=(n_tiles,),
        in_specs=[p_spec, w_spec, vec_spec, vec_spec],
        out_specs=pl.BlockSpec((COUT, tm), lambda i: (0, i)),
        out_shape=jax.ShapeDtypeStruct((COUT, m_pad), jnp.float32),
        compiler_params=pltpu.CompilerParams(
            dimension_semantics=("parallel",),                   # independent tiles -> megacore on v7x
            vmem_limit_bytes=32 * 1024 * 1024),
        cost_estimate=pl.CostEstimate(flops=flops, transcendentals=0,
                                      bytes_accessed=p_bytes + w_bytes + COUT * m_pad * 4),
    )(patches, w_t, scale, shift)

    out = out_km[:, :m].reshape(COUT, n, ho, wo)
    return jnp.transpose(out, (1, 0, 2, 3))                      # -> NCHW


if __name__ == "__main__":
    key = jax.random.PRNGKey(0)
    k_x, k_w, k_b, k_g, k_beta = jax.random.split(key, 5)

    N, H, W = 2, 16, 16
    x = jax.random.normal(k_x, (N, CIN, H, W), dtype=jnp.float32)

    fan_in = CIN * KSIZE * KSIZE
    conv_w = jax.random.normal(k_w, (COUT, CIN, KSIZE, KSIZE), dtype=jnp.float32) / fan_in ** 0.5
    conv_b = 0.1 * jax.random.normal(k_b, (COUT,), dtype=jnp.float32)
    bn_gamma = 1.0 + 0.1 * jax.random.normal(k_g, (COUT,), dtype=jnp.float32)
    bn_beta = 0.1 * jax.random.normal(k_beta, (COUT,), dtype=jnp.float32)

    out = jax.jit(firstlayer_forward)(x, conv_w, conv_b, bn_gamma, bn_beta)
    out = jax.block_until_ready(out)
    assert out.shape == (N, COUT, H // 2, W // 2), out.shape

    # Pure-JAX f32 reference (conv + bias + training-mode BN + ReLU); loose tol for bf16 MXU operands.
    y = jax.lax.conv_general_dilated(x, conv_w, (STRIDE, STRIDE), ((PAD, PAD), (PAD, PAD)),
                                     dimension_numbers=("NCHW", "OIHW", "NCHW"))
    y = y + conv_b.reshape(1, COUT, 1, 1)
    mu = y.mean(axis=(0, 2, 3), keepdims=True)
    var = ((y - mu) ** 2).mean(axis=(0, 2, 3), keepdims=True)
    ref = jnp.maximum((y - mu) * jax.lax.rsqrt(var + BN_EPS) * bn_gamma.reshape(1, COUT, 1, 1)
                      + bn_beta.reshape(1, COUT, 1, 1), 0.0)
    err = float(jnp.max(jnp.abs(out - ref)))
    assert err < 0.15, f"max abs err {err}"
    print("KERNEL_OK")
</pallas_src>

<mosaic_0001>
module attributes {stable_mosaic.version = 11 : i64} {
  func.func @_stats_kernel(%arg0: i32, %arg1: memref<147x128xbf16, #tpu.memory_space<vmem>>, %arg2: memref<64x147xbf16, #tpu.memory_space<vmem>>, %arg3: memref<64x1xf32, #tpu.memory_space<vmem>>, %arg4: memref<64x1xf32, #tpu.memory_space<vmem>>) attributes {dimension_semantics = [#tpu.dimension_semantics<arbitrary>], iteration_bounds = array<i64: 1>, scalar_prefetch = 0 : i64, scratch_operands = 0 : i64, tpu.core_type = #tpu.core_type<tc>, window_params = [{transform_indices = @transform_0, window_bounds = array<i64: 147, 128>}, {pipeline_mode = #tpu.pipeline_mode<synchronous>, transform_indices = @transform_1, window_bounds = array<i64: 64, 147>}, {pipeline_mode = #tpu.pipeline_mode<synchronous>, transform_indices = @transform_2, window_bounds = array<i64: 64, 1>}, {pipeline_mode = #tpu.pipeline_mode<synchronous>, transform_indices = @transform_3, window_bounds = array<i64: 64, 1>}]} {
    %c0_i32 = arith.constant 0 : i32
    %0 = arith.cmpi eq, %arg0, %c0_i32 : i32
    %1 = arith.extui %0 : i1 to i32
    %c0_i32_0 = arith.constant 0 : i32
    %2 = arith.cmpi ne, %1, %c0_i32_0 : i32
    scf.if %2 {
      %cst_14 = arith.constant 0.000000e+00 : f32
      %17 = vector.broadcast %cst_14 : f32 to vector<64x1xf32>
      %c0_15 = arith.constant 0 : index
      %c0_16 = arith.constant 0 : index
      %18 = vector.load %arg3[%c0_15, %c0_16] : memref<64x1xf32, #tpu.memory_space<vmem>>, vector<64x1xf32>
      tpu.vector_store %arg3[%c0_15, %c0_16], %17 {strides = array<i32>} : memref<64x1xf32, #tpu.memory_space<vmem>>, vector<64x1xf32>,
      %cst_17 = arith.constant 0.000000e+00 : f32
      %19 = vector.broadcast %cst_17 : f32 to vector<64x1xf32>
      %c0_18 = arith.constant 0 : index
      %c0_19 = arith.constant 0 : index
      %20 = vector.load %arg4[%c0_18, %c0_19] : memref<64x1xf32, #tpu.memory_space<vmem>>, vector<64x1xf32>
      tpu.vector_store %arg4[%c0_18, %c0_19], %19 {strides = array<i32>} : memref<64x1xf32, #tpu.memory_space<vmem>>, vector<64x1xf32>,
    } else {
    }
    %c0 = arith.constant 0 : index
    %c0_1 = arith.constant 0 : index
    %3 = vector.load %arg2[%c0, %c0_1] : memref<64x147xbf16, #tpu.memory_space<vmem>>, vector<64x147xbf16>
    %c0_2 = arith.constant 0 : index
    %c0_3 = arith.constant 0 : index
    %4 = vector.load %arg1[%c0_2, %c0_3] : memref<147x128xbf16, #tpu.memory_space<vmem>>, vector<147x128xbf16>
    %cst = arith.constant dense<0.000000e+00> : vector<64x128xf32>
    %5 = tpu.matmul %3, %4, %cst {dimension_numbers = #tpu.dot_dimension_numbers<[1], [0], [0], [1], [0, 0, 1, 1], [], []>} : vector<64x147xbf16>, vector<147x128xbf16>, vector<64x128xf32> -> vector<64x128xf32>
    %c0_4 = arith.constant 0 : index
    %c0_5 = arith.constant 0 : index
    %6 = vector.load %arg3[%c0_4, %c0_5] : memref<64x1xf32, #tpu.memory_space<vmem>>, vector<64x1xf32>
    %cst_6 = arith.constant dense<0.000000e+00> : vector<64xf32>
    %7 = vector.multi_reduction <add>, %5, %cst_6 [1] : vector<64x128xf32> to vector<64xf32>
    %8 = vector.shape_cast %7 : vector<64xf32> to vector<64x1xf32>
    %9 = arith.addf %6, %8 : vector<64x1xf32>
    %c0_7 = arith.constant 0 : index
    %c0_8 = arith.constant 0 : index
    %10 = vector.load %arg3[%c0_7, %c0_8] : memref<64x1xf32, #tpu.memory_space<vmem>>, vector<64x1xf32>
    tpu.vector_store %arg3[%c0_7, %c0_8], %9 {strides = array<i32>} : memref<64x1xf32, #tpu.memory_space<vmem>>, vector<64x1xf32>,
    %c0_9 = arith.constant 0 : index
    %c0_10 = arith.constant 0 : index
    %11 = vector.load %arg4[%c0_9, %c0_10] : memref<64x1xf32, #tpu.memory_space<vmem>>, vector<64x1xf32>
    %12 = arith.mulf %5, %5 : vector<64x128xf32>
    %cst_11 = arith.constant dense<0.000000e+00> : vector<64xf32>
    %13 = vector.multi_reduction <add>, %12, %cst_11 [1] : vector<64x128xf32> to vector<64xf32>
    %14 = vector.shape_cast %13 : vector<64xf32> to vector<64x1xf32>
    %15 = arith.addf %11, %14 : vector<64x1xf32>
    %c0_12 = arith.constant 0 : index
    %c0_13 = arith.constant 0 : index
    %16 = vector.load %arg4[%c0_12, %c0_13] : memref<64x1xf32, #tpu.memory_space<vmem>>, vector<64x1xf32>
    tpu.vector_store %arg4[%c0_12, %c0_13], %15 {strides = array<i32>} : memref<64x1xf32, #tpu.memory_space<vmem>>, vector<64x1xf32>,
    return
  }
  func.func @transform_0(%arg0: i32) -> (i32, i32) {
    %c0_i32 = arith.constant 0 : i32
    %c0_i32_0 = arith.constant 0 : i32
    return %c0_i32, %arg0 : i32, i32
  }
  func.func @transform_1(%arg0: i32) -> (i32, i32) {
    %c0_i32 = arith.constant 0 : i32
    %c0_i32_0 = arith.constant 0 : i32
    %c0_i32_1 = arith.constant 0 : i32
    return %c0_i32, %c0_i32_0 : i32, i32
  }
  func.func @transform_2(%arg0: i32) -> (i32, i32) {
    %c0_i32 = arith.constant 0 : i32
    %c0_i32_0 = arith.constant 0 : i32
    %c0_i32_1 = arith.constant 0 : i32
    return %c0_i32, %c0_i32_0 : i32, i32
  }
  func.func @transform_3(%arg0: i32) -> (i32, i32) {
    %c0_i32 = arith.constant 0 : i32
    %c0_i32_0 = arith.constant 0 : i32
    %c0_i32_1 = arith.constant 0 : i32
    return %c0_i32, %c0_i32_0 : i32, i32
  }
}

module attributes {stable_mosaic.version = 11 : i64} {
  func.func @_norm_kernel(%arg0: i32, %arg1: memref<147x128xbf16, #tpu.memory_space<vmem>>, %arg2: memref<64x147xbf16, #tpu.memory_space<vmem>>, %arg3: memref<64x1xf32, #tpu.memory_space<vmem>>, %arg4: memref<64x1xf32, #tpu.memory_space<vmem>>, %arg5: memref<64x128xf32, #tpu.memory_space<vmem>>) attributes {dimension_semantics = [#tpu.dimension_semantics<parallel>], iteration_bounds = array<i64: 1>, scalar_prefetch = 0 : i64, scratch_operands = 0 : i64, tpu.core_type = #tpu.core_type<tc>, window_params = [{transform_indices = @transform_0, window_bounds = array<i64: 147, 128>}, {pipeline_mode = #tpu.pipeline_mode<synchronous>, transform_indices = @transform_1, window_bounds = array<i64: 64, 147>}, {pipeline_mode = #tpu.pipeline_mode<synchronous>, transform_indices = @transform_2, window_bounds = array<i64: 64, 1>}, {pipeline_mode = #tpu.pipeline_mode<synchronous>, transform_indices = @transform_3, window_bounds = array<i64: 64, 1>}, {transform_indices = @transform_4, window_bounds = array<i64: 64, 128>}]} {
    %c0 = arith.constant 0 : index
    %c0_0 = arith.constant 0 : index
    %0 = vector.load %arg2[%c0, %c0_0] : memref<64x147xbf16, #tpu.memory_space<vmem>>, vector<64x147xbf16>
    %c0_1 = arith.constant 0 : index
    %c0_2 = arith.constant 0 : index
    %1 = vector.load %arg1[%c0_1, %c0_2] : memref<147x128xbf16, #tpu.memory_space<vmem>>, vector<147x128xbf16>
    %cst = arith.constant dense<0.000000e+00> : vector<64x128xf32>
    %2 = tpu.matmul %0, %1, %cst {dimension_numbers = #tpu.dot_dimension_numbers<[1], [0], [0], [1], [0, 0, 1, 1], [], []>} : vector<64x147xbf16>, vector<147x128xbf16>, vector<64x128xf32> -> vector<64x128xf32>
    %c0_3 = arith.constant 0 : index
    %c0_4 = arith.constant 0 : index
    %3 = vector.load %arg3[%c0_3, %c0_4] : memref<64x1xf32, #tpu.memory_space<vmem>>, vector<64x1xf32>
    %4 = vector.broadcast %3 : vector<64x1xf32> to vector<64x128xf32>
    %5 = arith.mulf %2, %4 : vector<64x128xf32>
    %c0_5 = arith.constant 0 : index
    %c0_6 = arith.constant 0 : index
    %6 = vector.load %arg4[%c0_5, %c0_6] : memref<64x1xf32, #tpu.memory_space<vmem>>, vector<64x1xf32>
    %7 = vector.broadcast %6 : vector<64x1xf32> to vector<64x128xf32>
    %8 = arith.addf %5, %7 : vector<64x128xf32>
    %cst_7 = arith.constant 0.000000e+00 : f32
    %9 = vector.broadcast %cst_7 : f32 to vector<64x128xf32>
    %10 = arith.maximumf %8, %9 : vector<64x128xf32>
    %c0_8 = arith.constant 0 : index
    %c0_9 = arith.constant 0 : index
    %11 = vector.load %arg5[%c0_8, %c0_9] : memref<64x128xf32, #tpu.memory_space<vmem>>, vector<64x128xf32>
    tpu.vector_store %arg5[%c0_8, %c0_9], %10 {strides = array<i32>} : memref<64x128xf32, #tpu.memory_space<vmem>>, vector<64x128xf32>,
    return
  }
  func.func @transform_0(%arg0: i32) -> (i32, i32) {
    %c0_i32 = arith.constant 0 : i32
    %c0_i32_0 = arith.constant 0 : i32
    return %c0_i32, %arg0 : i32, i32
  }
  func.func @transform_1(%arg0: i32) -> (i32, i32) {
    %c0_i32 = arith.constant 0 : i32
    %c0_i32_0 = arith.constant 0 : i32
    %c0_i32_1 = arith.constant 0 : i32
    return %c0_i32, %c0_i32_0 : i32, i32
  }
  func.func @transform_2(%arg0: i32) -> (i32, i32) {
    %c0_i32 = arith.constant 0 : i32
    %c0_i32_0 = arith.constant 0 : i32
    %c0_i32_1 = arith.constant 0 : i32
    return %c0_i32, %c0_i32_0 : i32, i32
  }
  func.func @transform_3(%arg0: i32) -> (i32, i32) {
    %c0_i32 = arith.constant 0 : i32
    %c0_i32_0 = arith.constant 0 : i32
    %c0_i32_1 = arith.constant 0 : i32
    return %c0_i32, %c0_i32_0 : i32, i32
  }
  func.func @transform_4(%arg0: i32) -> (i32, i32) {
    %c0_i32 = arith.constant 0 : i32
    %c0_i32_0 = arith.constant 0 : i32
    return %c0_i32, %arg0 : i32, i32
  }
}

</mosaic_0001>

<llo_original>
// kernel: firstlayer_forward.3
$region0: #{firstlayer_forward.3}
  #allocation0 [shape = 'u32[]', space=smem, size = 0x4, offset = 0x4, fixed_abs, tag = 'smem constant byte address 0x4 - core index']
  #allocation1 [shape = 'u32[144,128]{1,0:T(1,128)}', space=vmem, size = 0x12000, scoped, tag = 'internal scratch']
  %s0 = inlined_call_operand.vmem [shape: bf16[147,128], index: 0, kind: input, shape index: {}]
  %s1 = inlined_call_operand.vmem [shape: bf16[64,147], index: 1, kind: input, shape index: {}]
  %s2 = inlined_call_operand.vmem [shape: f32[64,1], index: 2, kind: input, shape index: {}]
  %s3 = inlined_call_operand.vmem [shape: f32[64,1], index: 3, kind: input, shape index: {}]
  %s4 = inlined_call_operand.vmem [shape: f32[64,128], index: 4, kind: output, shape index: {}]
  %s5 = sld [smem:[#allocation0]]
  $region26: #{firstlayer_forward.3} parent=0
    _
  %s7 = ssub.s32 1, %s5
  %s8 = scalar_select 0, %s7, %s5
  // Predicated region
  $region2: #{firstlayer_forward.3} parent=0 // pred_check
    _
  $region3: #{firstlayer_forward.3} parent=0 // pred_check_branch
    %10 = sbr.rel (0) target = $region5
  $region4: #{firstlayer_forward.3} parent=0 // pred_region
    _
  $region5: #{firstlayer_forward.3} parent=0 // pred_fallthru
    _
  // Predicated region
  $region6: #{firstlayer_forward.3} parent=0 // pred_check
    _
  $region7: #{firstlayer_forward.3} parent=0 // pred_check_branch
    %12 = sbr.rel (0) target = $region9
  $region8: #{firstlayer_forward.3} parent=0 // pred_region
    _
  $region9: #{firstlayer_forward.3} parent=0 // pred_fallthru
    _
  // Predicated region
  $region10: #{firstlayer_forward.3} parent=0 // pred_check
    _
  $region11: #{firstlayer_forward.3} parent=0 // pred_check_branch
    %14 = sbr.rel (0) target = $region13
  $region12: #{firstlayer_forward.3} parent=0 // pred_region
    _
  $region13: #{firstlayer_forward.3} parent=0 // pred_fallthru
    _
  // Predicated region
  $region14: #{firstlayer_forward.3} parent=0 // pred_check
    _
  $region15: #{firstlayer_forward.3} parent=0 // pred_check_branch
    %16 = sbr.rel (0) target = $region17
  $region16: #{firstlayer_forward.3} parent=0 // pred_region
    _
  $region17: #{firstlayer_forward.3} parent=0 // pred_fallthru
    _
  %v18 = vld [vmem:[%s1] sm:$0xff]
  %v19 = vld [vmem:[%s1 + $0x8] sm:$0xff]
  %v20 = vld [vmem:[%s1 + $0x10] sm:$0xff]
  %v21 = vld [vmem:[%s1 + $0x18] sm:$0xff]
  %v22 = vld [vmem:[%s1 + $0x20] sm:$0xff]
  %v23 = vld [vmem:[%s1 + $0x28] sm:$0xff]
  %v24 = vld [vmem:[%s1 + $0x30] sm:$0xff]
  %v25 = vld [vmem:[%s1 + $0x38] sm:$0xff]
  %v26 = vld [vmem:[%s0] sm:$0xf]
  %v27 = vld [vmem:[%s0 + $0x4] sm:$0xf]
  %v28 = vld [vmem:[%s0 + $0x8] sm:$0xf]
  %v29 = vld [vmem:[%s0 + $0xc] sm:$0xf]
  %v30 = vld [vmem:[%s0 + $0x10] sm:$0xf]
  %v31 = vld [vmem:[%s0 + $0x14] sm:$0xf]
  %v32 = vld [vmem:[%s0 + $0x18] sm:$0xf]
  %v33 = vld [vmem:[%s0 + $0x1c] sm:$0xf]
  %v34 = vld [vmem:[%s0 + $0x20] sm:$0xf]
  %v35 = vld [vmem:[%s0 + $0x24] sm:$0xf]
  %v36 = vld [vmem:[%s0 + $0x28] sm:$0xf]
  %v37 = vld [vmem:[%s0 + $0x2c] sm:$0xf]
  %v38 = vld [vmem:[%s0 + $0x30] sm:$0xf]
  %v39 = vld [vmem:[%s0 + $0x34] sm:$0xf]
  %v40 = vld [vmem:[%s0 + $0x38] sm:$0xf]
  %v41 = vld [vmem:[%s0 + $0x3c] sm:$0xf]
  %v42 = vld [vmem:[%s0 + $0x40] sm:$0xf]
  %v43 = vld [vmem:[%s0 + $0x44] sm:$0xf]
  %v44 = vld [vmem:[%s0 + $0x48] sm:$0x3]
  %v53 = vunpack.c.l.b16 %v18
  %v54 = vunpack.c.h.b16 %v18
  %v55 = vunpack.c.l.b16 %v19
  %v56 = vunpack.c.h.b16 %v19
  %v57 = vunpack.c.l.b16 %v20
  %v58 = vunpack.c.h.b16 %v20
  %v59 = vunpack.c.l.b16 %v21
  %v60 = vunpack.c.h.b16 %v21
  %v61 = vunpack.c.l.b16 %v22
  %v62 = vunpack.c.h.b16 %v22
  %v63 = vunpack.c.l.b16 %v23
  %v64 = vunpack.c.h.b16 %v23
  %v65 = vunpack.c.l.b16 %v24
  %v66 = vunpack.c.h.b16 %v24
  %v67 = vunpack.c.l.b16 %v25
  %v68 = vunpack.c.h.b16 %v25
  %v69 = vpack.c.b16 %v55, %v53
  %v70 = vpack.c.b16 %v56, %v54
  %v71 = vpack.c.b16 %v59, %v57
  %v72 = vpack.c.b16 %v60, %v58
  %v73 = vpack.c.b16 %v63, %v61
  %v74 = vpack.c.b16 %v64, %v62
  %v75 = vpack.c.b16 %v67, %v65
  %v76 = vpack.c.b16 %v68, %v66
  %v100 = vunpack.c.l.b16 %v26
  %v101 = vunpack.c.l.b16 %v27
  %v102 = vunpack.c.l.b16 %v28
  %v103 = vunpack.c.l.b16 %v29
  %v104 = vunpack.c.l.b16 %v30
  %v105 = vunpack.c.l.b16 %v31
  %v106 = vunpack.c.l.b16 %v32
  %v107 = vunpack.c.l.b16 %v33
  %v108 = vunpack.c.l.b16 %v34
  %v109 = vunpack.c.l.b16 %v35
  %v110 = vunpack.c.l.b16 %v36
  %v111 = vunpack.c.l.b16 %v37
  %v112 = vunpack.c.l.b16 %v38
  %v113 = vunpack.c.l.b16 %v39
  %v114 = vunpack.c.l.b16 %v40
  %v115 = vunpack.c.l.b16 %v41
  %v116 = vunpack.c.l.b16 %v42
  %v117 = vunpack.c.l.b16 %v43
  %v118 = vunpack.c.l.b16 %v44
  %v119 = vpack.c.b16 %v101, %v100
  %v120 = vpack.c.b16 %v103, %v102
  %v121 = vpack.c.b16 %v105, %v104
  %v122 = vpack.c.b16 %v107, %v106
  %v123 = vpack.c.b16 %v109, %v108
  %v124 = vpack.c.b16 %v111, %v110
  %v125 = vpack.c.b16 %v113, %v112
  %v126 = vpack.c.b16 %v115, %v114
  %v127 = vpack.c.b16 %v117, %v116
  %v128 = vpack.c.b16 %v118, %v118
  %vm138 = vcmask 154624
  %v140 = vsel %vm138, %v70, 0
  %v143 = vsel %vm138, %v72, 0
  %v146 = vsel %vm138, %v74, 0
  %v149 = vsel %vm138, %v76, 0
  %vm151 = vcmask 1040384
  %vm152 = vcmask 1041408
  %v153 = vsel %vm151, 4294967295, 65535
  %v154 = vsel %vm152, %v153, 0
  %v156 = vand.u32 %v128, %v154
  %158 = vmatprep.subr.bf16.mxu0 0
  %159 = vmatpush1.bf16.msra.mxu0 %v126
  %160 = vmatprep.subr.bf16.mxu0 0
  %161 = vmatpush1.bf16.msra.mxu0 %v125
  %162 = vmatprep.subr.bf16.mxu0 0
  %163 = vmatpush1.bf16.msra.mxu0 %v124
  %164 = vmatprep.subr.bf16.mxu0 0
  %165 = vmatpush1.bf16.msra.mxu0 %v123
  %166 = vmatprep.subr.bf16.mxu0 0
  %167 = vmatpush1.bf16.msra.mxu0 %v122
  %168 = vmatprep.subr.bf16.mxu0 0
  %169 = vmatpush1.bf16.msra.mxu0 %v121
  %170 = vmatprep.subr.bf16.mxu0 0
  %171 = vmatpush1.bf16.msra.mxu0 %v120
  %172 = vmatprep.subr.bf16.mxu0 0
  %173 = vmatpush1.bf16.msra.mxu0 %v119
  %174 = vmatprep.subr.bf16.mxu0 0
  %175 = vmatpush2.bf16.msra.mxu0 0
  %176 = vmatprep.subr.bf16.mxu0 0
  %177 = vmatpush2.bf16.msra.mxu0 0
  %178 = vmatprep.subr.bf16.mxu0 0
  %179 = vmatpush2.bf16.msra.mxu0 0
  %180 = vmatprep.subr.bf16.mxu0 0
  %181 = vmatpush2.bf16.msra.mxu0 0
  %182 = vmatprep.subr.bf16.mxu0 0
  %183 = vmatpush2.bf16.msra.mxu0 0
  %184 = vmatprep.subr.bf16.mxu0 0
  %185 = vmatpush2.bf16.msra.mxu0 0
  %186 = vmatprep.subr.bf16.mxu0 0
  %187 = vmatpush2.bf16.msra.mxu0 %v156
  %188 = vmatprep.subr.bf16.mxu0 0
  %189 = vmatpush2.bf16.msra.mxu0 %v127
  %190 = vmatprep.mubr.bf16.mxu0 %v140
  %191 = vmatmul.mubr.bf16.gmra.mxu0 %v69
  %v192 = vpop.f32.mrf.mxu0
  %v193 = vadd.f32 0.0, %v192
  %v194 = vpop.f32.mrf.mxu0
  %v195 = vpop.f32.mrf.mxu0
  %v196 = vadd.f32 0.0, %v195
  %v197 = vpop.f32.mrf.mxu0
  %198 = vmatprep.mubr.bf16.mxu0 %v143
  %199 = vmatmul.mubr.bf16.gmra.mxu0 %v71
  %v200 = vpop.f32.mrf.mxu0
  %v201 = vadd.f32 0.0, %v200
  %v202 = vpop.f32.mrf.mxu0
  %v203 = vpop.f32.mrf.mxu0
  %v204 = vadd.f32 0.0, %v203
  %v205 = vpop.f32.mrf.mxu0
  %206 = vmatprep.mubr.bf16.mxu0 %v146
  %207 = vmatmul.mubr.bf16.gmra.mxu0 %v73
  %v208 = vpop.f32.mrf.mxu0
  %v209 = vadd.f32 0.0, %v208
  %v210 = vpop.f32.mrf.mxu0
  %v211 = vpop.f32.mrf.mxu0
  %v212 = vadd.f32 0.0, %v211
  %v213 = vpop.f32.mrf.mxu0
  %214 = vmatprep.mubr.bf16.mxu0 %v149
  %215 = vmatmul.mubr.bf16.gmra.mxu0 %v75
  %v216 = vpop.f32.mrf.mxu0
  %v217 = vadd.f32 0.0, %v216
  %v218 = vpop.f32.mrf.mxu0
  %v219 = vpop.f32.mrf.mxu0
  %v220 = vadd.f32 0.0, %v219
  %v221 = vpop.f32.mrf.mxu0
  %222 = vdwg.mxu0
  %v223 = vld [vmem:[%s2] sm:$0xff]
  %v224 = vld [vmem:[%s2 + $0x8] sm:$0xff]
  %v225 = vld [vmem:[%s2 + $0x10] sm:$0xff]
  %v226 = vld [vmem:[%s2 + $0x18] sm:$0xff]
  %v227 = vld [vmem:[%s2 + $0x20] sm:$0xff]
  %v228 = vld [vmem:[%s2 + $0x28] sm:$0xff]
  %v229 = vld [vmem:[%s2 + $0x30] sm:$0xff]
  %v230 = vld [vmem:[%s2 + $0x38] sm:$0xff]
  %232 = vset.pattern.permute.xlu0 0
  %233 = vperm.xlu0 %232, %v223
  %v234 = vpop.permute.xlu0 %233
  %237 = vset.pattern.permute.xlu0 0
  %238 = vperm.xlu0 %237, %v224
  %v239 = vpop.permute.xlu0 %238
  %242 = vset.pattern.permute.xlu0 0
  %243 = vperm.xlu0 %242, %v225
  %v244 = vpop.permute.xlu0 %243
  %247 = vset.pattern.permute.xlu0 0
  %248 = vperm.xlu0 %247, %v226
  %v249 = vpop.permute.xlu0 %248
  %252 = vset.pattern.permute.xlu0 0
  %253 = vperm.xlu0 %252, %v227
  %v254 = vpop.permute.xlu0 %253
  %257 = vset.pattern.permute.xlu0 0
  %258 = vperm.xlu0 %257, %v228
  %v259 = vpop.permute.xlu0 %258
  %262 = vset.pattern.permute.xlu0 0
  %263 = vperm.xlu0 %262, %v229
  %v264 = vpop.permute.xlu0 %263
  %267 = vset.pattern.permute.xlu0 0
  %268 = vperm.xlu0 %267, %v230
  %v269 = vpop.permute.xlu0 %268
  %v271 = vmul.f32 %v193, %v234
  %v272 = vmul.f32 %v196, %v239
  %v273 = vmul.f32 %v201, %v244
  %v274 = vmul.f32 %v204, %v249
  %v275 = vmul.f32 %v209, %v254
  %v276 = vmul.f32 %v212, %v259
  %v277 = vmul.f32 %v217, %v264
  %v278 = vmul.f32 %v220, %v269
  %v279 = vld [vmem:[%s3] sm:$0xff]
  %v280 = vld [vmem:[%s3 + $0x8] sm:$0xff]
  %v281 = vld [vmem:[%s3 + $0x10] sm:$0xff]
  %v282 = vld [vmem:[%s3 + $0x18] sm:$0xff]
  %v283 = vld [vmem:[%s3 + $0x20] sm:$0xff]
  %v284 = vld [vmem:[%s3 + $0x28] sm:$0xff]
  %v285 = vld [vmem:[%s3 + $0x30] sm:$0xff]
  %v286 = vld [vmem:[%s3 + $0x38] sm:$0xff]
  %288 = vset.pattern.permute.xlu0 0
  %289 = vperm.xlu0 %288, %v279
  %v290 = vpop.permute.xlu0 %289
  %293 = vset.pattern.permute.xlu0 0
  %294 = vperm.xlu0 %293, %v280
  %v295 = vpop.permute.xlu0 %294
  %298 = vset.pattern.permute.xlu0 0
  %299 = vperm.xlu0 %298, %v281
  %v300 = vpop.permute.xlu0 %299
  %303 = vset.pattern.permute.xlu0 0
  %304 = vperm.xlu0 %303, %v282
  %v305 = vpop.permute.xlu0 %304
  %308 = vset.pattern.permute.xlu0 0
  %309 = vperm.xlu0 %308, %v283
  %v310 = vpop.permute.xlu0 %309
  %313 = vset.pattern.permute.xlu0 0
  %314 = vperm.xlu0 %313, %v284
  %v315 = vpop.permute.xlu0 %314
  %318 = vset.pattern.permute.xlu0 0
  %319 = vperm.xlu0 %318, %v285
  %v320 = vpop.permute.xlu0 %319
  %323 = vset.pattern.permute.xlu0 0
  %324 = vperm.xlu0 %323, %v286
  %v325 = vpop.permute.xlu0 %324
  %v327 = vadd.f32 %v271, %v290
  %v328 = vadd.f32 %v272, %v295
  %v329 = vadd.f32 %v273, %v300
  %v330 = vadd.f32 %v274, %v305
  %v331 = vadd.f32 %v275, %v310
  %v332 = vadd.f32 %v276, %v315
  %v333 = vadd.f32 %v277, %v320
  %v334 = vadd.f32 %v278, %v325
  %v335 = vmax.f32 %v327, 0.0
  %v336 = vmax.f32 %v328, 0.0
  %v337 = vmax.f32 %v329, 0.0
  %v338 = vmax.f32 %v330, 0.0
  %v339 = vmax.f32 %v331, 0.0
  %v340 = vmax.f32 %v332, 0.0
  %v341 = vmax.f32 %v333, 0.0
  %v342 = vmax.f32 %v334, 0.0
  %343 = vst [vmem:[%s4] sm:$0xff] %v335
  %344 = vst [vmem:[%s4 + $0x8] sm:$0xff] %v336
  %345 = vst [vmem:[%s4 + $0x10] sm:$0xff] %v337
  %346 = vst [vmem:[%s4 + $0x18] sm:$0xff] %v338
  %347 = vst [vmem:[%s4 + $0x20] sm:$0xff] %v339
  %348 = vst [vmem:[%s4 + $0x28] sm:$0xff] %v340
  %349 = vst [vmem:[%s4 + $0x30] sm:$0xff] %v341
  %350 = vst [vmem:[%s4 + $0x38] sm:$0xff] %v342
  // Predicated region
  $region18: #{firstlayer_forward.3} parent=0 // pred_check
    _
  $region19: #{firstlayer_forward.3} parent=0 // pred_check_branch
    %352 = sbr.rel (0) target = $region21
  $region20: #{firstlayer_forward.3} parent=0 // pred_region
    _
  $region21: #{firstlayer_forward.3} parent=0 // pred_fallthru
    _
  // Predicated region
  $region22: #{firstlayer_forward.3} parent=0 // pred_check
    _
  $region23: #{firstlayer_forward.3} parent=0 // pred_check_branch
    %354 = sbr.rel (0) target = $region25
  $region24: #{firstlayer_forward.3} parent=0 // pred_region
    _
  $region25: #{firstlayer_forward.3} parent=0 // pred_fallthru
    _

// kernel: firstlayer_forward.2
$region0: #{firstlayer_forward.2}
  #allocation0 [shape = 'u32[]', space=smem, size = 0x4, offset = 0x4, fixed_abs, tag = 'smem constant byte address 0x4 - core index']
  #allocation1 [shape = 'u32[144,128]{1,0:T(1,128)}', space=vmem, size = 0x12000, scoped, tag = 'internal scratch']
  %s0 = inlined_call_operand.vmem [shape: bf16[147,128], index: 0, kind: input, shape index: {}]
  %s1 = inlined_call_operand.vmem [shape: bf16[64,147], index: 1, kind: input, shape index: {}]
  %s2 = inlined_call_operand.vmem [shape: f32[64,1], index: 2, kind: output, shape index: {0}]
  %s3 = inlined_call_operand.vmem [shape: f32[64,1], index: 3, kind: output, shape index: {1}]
  %4 = xla_tuple %s2, %s3
  %s5 = sld [smem:[#allocation0]]
  $region30: #{firstlayer_forward.2} parent=0
    _
  %s7 = ssub.s32 1, %s5
  %s8 = scalar_select 0, %s7, %s5
  // Predicated region
  $region2: #{firstlayer_forward.2} parent=0 // pred_check
    _
  $region3: #{firstlayer_forward.2} parent=0 // pred_check_branch
    %10 = sbr.rel (0) target = $region5
  $region4: #{firstlayer_forward.2} parent=0 // pred_region
    _
  $region5: #{firstlayer_forward.2} parent=0 // pred_fallthru
    _
  // Predicated region
  $region6: #{firstlayer_forward.2} parent=0 // pred_check
    _
  $region7: #{firstlayer_forward.2} parent=0 // pred_check_branch
    %12 = sbr.rel (0) target = $region9
  $region8: #{firstlayer_forward.2} parent=0 // pred_region
    _
  $region9: #{firstlayer_forward.2} parent=0 // pred_fallthru
    _
  %p14 = scmp.eq.s32.totalorder 0, 0
  // Predicated region
  $region10: #{firstlayer_forward.2} parent=0 // pred_check
    %p15 = pneg %p14
  $region11: #{firstlayer_forward.2} parent=0 // pred_check_branch
    %17 = sbr.rel (%p15) target = $region13
  $region12: #{firstlayer_forward.2} parent=0 // pred_region
    %vm18 = vcmask 7168
    %19 = vst.msk [vmem:[%s2] sm:$0xff] %vm18, 0.0
    %20 = vst.msk [vmem:[%s2 + $0x8] sm:$0xff] %vm18, 0.0
    %21 = vst.msk [vmem:[%s2 + $0x10] sm:$0xff] %vm18, 0.0
    %22 = vst.msk [vmem:[%s2 + $0x18] sm:$0xff] %vm18, 0.0
    %23 = vst.msk [vmem:[%s2 + $0x20] sm:$0xff] %vm18, 0.0
    %24 = vst.msk [vmem:[%s2 + $0x28] sm:$0xff] %vm18, 0.0
    %25 = vst.msk [vmem:[%s2 + $0x30] sm:$0xff] %vm18, 0.0
    %26 = vst.msk [vmem:[%s2 + $0x38] sm:$0xff] %vm18, 0.0
    %27 = vst.msk [vmem:[%s3] sm:$0xff] %vm18, 0.0
    %28 = vst.msk [vmem:[%s3 + $0x8] sm:$0xff] %vm18, 0.0
    %29 = vst.msk [vmem:[%s3 + $0x10] sm:$0xff] %vm18, 0.0
    %30 = vst.msk [vmem:[%s3 + $0x18] sm:$0xff] %vm18, 0.0
    %31 = vst.msk [vmem:[%s3 + $0x20] sm:$0xff] %vm18, 0.0
    %32 = vst.msk [vmem:[%s3 + $0x28] sm:$0xff] %vm18, 0.0
    %33 = vst.msk [vmem:[%s3 + $0x30] sm:$0xff] %vm18, 0.0
    %34 = vst.msk [vmem:[%s3 + $0x38] sm:$0xff] %vm18, 0.0
  $region13: #{firstlayer_forward.2} parent=0 // pred_fallthru
    _
  %v35 = vld [vmem:[%s1] sm:$0xff]
  %v36 = vld [vmem:[%s1 + $0x8] sm:$0xff]
  %v37 = vld [vmem:[%s1 + $0x10] sm:$0xff]
  %v38 = vld [vmem:[%s1 + $0x18] sm:$0xff]
  %v39 = vld [vmem:[%s1 + $0x20] sm:$0xff]
  %v40 = vld [vmem:[%s1 + $0x28] sm:$0xff]
  %v41 = vld [vmem:[%s1 + $0x30] sm:$0xff]
  %v42 = vld [vmem:[%s1 + $0x38] sm:$0xff]
  %v43 = vld [vmem:[%s0] sm:$0xf]
  %v44 = vld [vmem:[%s0 + $0x4] sm:$0xf]
  %v45 = vld [vmem:[%s0 + $0x8] sm:$0xf]
  %v46 = vld [vmem:[%s0 + $0xc] sm:$0xf]
  %v47 = vld [vmem:[%s0 + $0x10] sm:$0xf]
  %v48 = vld [vmem:[%s0 + $0x14] sm:$0xf]
  %v49 = vld [vmem:[%s0 + $0x18] sm:$0xf]
  %v50 = vld [vmem:[%s0 + $0x1c] sm:$0xf]
  %v51 = vld [vmem:[%s0 + $0x20] sm:$0xf]
  %v52 = vld [vmem:[%s0 + $0x24] sm:$0xf]
  %v53 = vld [vmem:[%s0 + $0x28] sm:$0xf]
  %v54 = vld [vmem:[%s0 + $0x2c] sm:$0xf]
  %v55 = vld [vmem:[%s0 + $0x30] sm:$0xf]
  %v56 = vld [vmem:[%s0 + $0x34] sm:$0xf]
  %v57 = vld [vmem:[%s0 + $0x38] sm:$0xf]
  %v58 = vld [vmem:[%s0 + $0x3c] sm:$0xf]
  %v59 = vld [vmem:[%s0 + $0x40] sm:$0xf]
  %v60 = vld [vmem:[%s0 + $0x44] sm:$0xf]
  %v61 = vld [vmem:[%s0 + $0x48] sm:$0x3]
  %v70 = vunpack.c.l.b16 %v35
  %v71 = vunpack.c.h.b16 %v35
  %v72 = vunpack.c.l.b16 %v36
  %v73 = vunpack.c.h.b16 %v36
  %v74 = vunpack.c.l.b16 %v37
  %v75 = vunpack.c.h.b16 %v37
  %v76 = vunpack.c.l.b16 %v38
  %v77 = vunpack.c.h.b16 %v38
  %v78 = vunpack.c.l.b16 %v39
  %v79 = vunpack.c.h.b16 %v39
  %v80 = vunpack.c.l.b16 %v40
  %v81 = vunpack.c.h.b16 %v40
  %v82 = vunpack.c.l.b16 %v41
  %v83 = vunpack.c.h.b16 %v41
  %v84 = vunpack.c.l.b16 %v42
  %v85 = vunpack.c.h.b16 %v42
  %v86 = vpack.c.b16 %v72, %v70
  %v87 = vpack.c.b16 %v73, %v71
  %v88 = vpack.c.b16 %v76, %v74
  %v89 = vpack.c.b16 %v77, %v75
  %v90 = vpack.c.b16 %v80, %v78
  %v91 = vpack.c.b16 %v81, %v79
  %v92 = vpack.c.b16 %v84, %v82
  %v93 = vpack.c.b16 %v85, %v83
  %v117 = vunpack.c.l.b16 %v43
  %v118 = vunpack.c.l.b16 %v44
  %v119 = vunpack.c.l.b16 %v45
  %v120 = vunpack.c.l.b16 %v46
  %v121 = vunpack.c.l.b16 %v47
  %v122 = vunpack.c.l.b16 %v48
  %v123 = vunpack.c.l.b16 %v49
  %v124 = vunpack.c.l.b16 %v50
  %v125 = vunpack.c.l.b16 %v51
  %v126 = vunpack.c.l.b16 %v52
  %v127 = vunpack.c.l.b16 %v53
  %v128 = vunpack.c.l.b16 %v54
  %v129 = vunpack.c.l.b16 %v55
  %v130 = vunpack.c.l.b16 %v56
  %v131 = vunpack.c.l.b16 %v57
  %v132 = vunpack.c.l.b16 %v58
  %v133 = vunpack.c.l.b16 %v59
  %v134 = vunpack.c.l.b16 %v60
  %v135 = vunpack.c.l.b16 %v61
  %v136 = vpack.c.b16 %v118, %v117
  %v137 = vpack.c.b16 %v120, %v119
  %v138 = vpack.c.b16 %v122, %v121
  %v139 = vpack.c.b16 %v124, %v123
  %v140 = vpack.c.b16 %v126, %v125
  %v141 = vpack.c.b16 %v128, %v127
  %v142 = vpack.c.b16 %v130, %v129
  %v143 = vpack.c.b16 %v132, %v131
  %v144 = vpack.c.b16 %v134, %v133
  %v145 = vpack.c.b16 %v135, %v135
  %vm155 = vcmask 154624
  %v157 = vsel %vm155, %v87, 0
  %v160 = vsel %vm155, %v89, 0
  %v163 = vsel %vm155, %v91, 0
  %v166 = vsel %vm155, %v93, 0
  %vm168 = vcmask 1040384
  %vm169 = vcmask 1041408
  %v170 = vsel %vm168, 4294967295, 65535
  %v171 = vsel %vm169, %v170, 0
  %v173 = vand.u32 %v145, %v171
  %175 = vmatprep.subr.bf16.mxu0 0
  %176 = vmatpush1.bf16.msra.mxu0 %v143
  %177 = vmatprep.subr.bf16.mxu0 0
  %178 = vmatpush1.bf16.msra.mxu0 %v142
  %179 = vmatprep.subr.bf16.mxu0 0
  %180 = vmatpush1.bf16.msra.mxu0 %v141
  %181 = vmatprep.subr.bf16.mxu0 0
  %182 = vmatpush1.bf16.msra.mxu0 %v140
  %183 = vmatprep.subr.bf16.mxu0 0
  %184 = vmatpush1.bf16.msra.mxu0 %v139
  %185 = vmatprep.subr.bf16.mxu0 0
  %186 = vmatpush1.bf16.msra.mxu0 %v138
  %187 = vmatprep.subr.bf16.mxu0 0
  %188 = vmatpush1.bf16.msra.mxu0 %v137
  %189 = vmatprep.subr.bf16.mxu0 0
  %190 = vmatpush1.bf16.msra.mxu0 %v136
  %191 = vmatprep.subr.bf16.mxu0 0
  %192 = vmatpush2.bf16.msra.mxu0 0
  %193 = vmatprep.subr.bf16.mxu0 0
  %194 = vmatpush2.bf16.msra.mxu0 0
  %195 = vmatprep.subr.bf16.mxu0 0
  %196 = vmatpush2.bf16.msra.mxu0 0
  %197 = vmatprep.subr.bf16.mxu0 0
  %198 = vmatpush2.bf16.msra.mxu0 0
  %199 = vmatprep.subr.bf16.mxu0 0
  %200 = vmatpush2.bf16.msra.mxu0 0
  %201 = vmatprep.subr.bf16.mxu0 0
  %202 = vmatpush2.bf16.msra.mxu0 0
  %203 = vmatprep.subr.bf16.mxu0 0
  %204 = vmatpush2.bf16.msra.mxu0 %v173
  %205 = vmatprep.subr.bf16.mxu0 0
  %206 = vmatpush2.bf16.msra.mxu0 %v144
  %207 = vmatprep.mubr.bf16.mxu0 %v157
  %208 = vmatmul.mubr.bf16.gmra.mxu0 %v86
  %v209 = vpop.f32.mrf.mxu0
  %v210 = vadd.f32 0.0, %v209
  %v211 = vpop.f32.mrf.mxu0
  %v212 = vpop.f32.mrf.mxu0
  %v213 = vadd.f32 0.0, %v212
  %v214 = vpop.f32.mrf.mxu0
  %215 = vmatprep.mubr.bf16.mxu0 %v160
  %216 = vmatmul.mubr.bf16.gmra.mxu0 %v88
  %v217 = vpop.f32.mrf.mxu0
  %v218 = vadd.f32 0.0, %v217
  %v219 = vpop.f32.mrf.mxu0
  %v220 = vpop.f32.mrf.mxu0
  %v221 = vadd.f32 0.0, %v220
  %v222 = vpop.f32.mrf.mxu0
  %223 = vmatprep.mubr.bf16.mxu0 %v163
  %224 = vmatmul.mubr.bf16.gmra.mxu0 %v90
  %v225 = vpop.f32.mrf.mxu0
  %v226 = vadd.f32 0.0, %v225
  %v227 = vpop.f32.mrf.mxu0
  %v228 = vpop.f32.mrf.mxu0
  %v229 = vadd.f32 0.0, %v228
  %v230 = vpop.f32.mrf.mxu0
  %231 = vmatprep.mubr.bf16.mxu0 %v166
  %232 = vmatmul.mubr.bf16.gmra.mxu0 %v92
  %v233 = vpop.f32.mrf.mxu0
  %v234 = vadd.f32 0.0, %v233
  %v235 = vpop.f32.mrf.mxu0
  %v236 = vpop.f32.mrf.mxu0
  %v237 = vadd.f32 0.0, %v236
  %v238 = vpop.f32.mrf.mxu0
  %239 = vdwg.mxu0
  %v240 = vld [vmem:[%s2] sm:$0xff]
  %v241 = vld [vmem:[%s2 + $0x8] sm:$0xff]
  %v242 = vld [vmem:[%s2 + $0x10] sm:$0xff]
  %v243 = vld [vmem:[%s2 + $0x18] sm:$0xff]
  %v244 = vld [vmem:[%s2 + $0x20] sm:$0xff]
  %v245 = vld [vmem:[%s2 + $0x28] sm:$0xff]
  %v246 = vld [vmem:[%s2 + $0x30] sm:$0xff]
  %v247 = vld [vmem:[%s2 + $0x38] sm:$0xff]
  %248 = vadd.xlane.f32.xlu0 %v210
  %v249 = vpop.xlane.xlu0 %248
  %250 = vadd.xlane.f32.xlu0 %v213
  %v251 = vpop.xlane.xlu0 %250
  %252 = vadd.xlane.f32.xlu0 %v218
  %v253 = vpop.xlane.xlu0 %252
  %254 = vadd.xlane.f32.xlu0 %v221
  %v255 = vpop.xlane.xlu0 %254
  %256 = vadd.xlane.f32.xlu0 %v226
  %v257 = vpop.xlane.xlu0 %256
  %258 = vadd.xlane.f32.xlu0 %v229
  %v259 = vpop.xlane.xlu0 %258
  %260 = vadd.xlane.f32.xlu0 %v234
  %v261 = vpop.xlane.xlu0 %260
  %262 = vadd.xlane.f32.xlu0 %v237
  %v263 = vpop.xlane.xlu0 %262
  %v264 = vadd.f32 %v240, %v249
  %v265 = vadd.f32 %v241, %v251
  %v266 = vadd.f32 %v242, %v253
  %v267 = vadd.f32 %v243, %v255
  %v268 = vadd.f32 %v244, %v257
  %v269 = vadd.f32 %v245, %v259
  %v270 = vadd.f32 %v246, %v261
  %v271 = vadd.f32 %v247, %v263
  %vm272 = vcmask 7168
  %273 = vst.msk [vmem:[%s2] sm:$0xff] %vm272, %v264
  %274 = vst.msk [vmem:[%s2 + $0x8] sm:$0xff] %vm272, %v265
  %275 = vst.msk [vmem:[%s2 + $0x10] sm:$0xff] %vm272, %v266
  %276 = vst.msk [vmem:[%s2 + $0x18] sm:$0xff] %vm272, %v267
  %277 = vst.msk [vmem:[%s2 + $0x20] sm:$0xff] %vm272, %v268
  %278 = vst.msk [vmem:[%s2 + $0x28] sm:$0xff] %vm272, %v269
  %279 = vst.msk [vmem:[%s2 + $0x30] sm:$0xff] %vm272, %v270
  %280 = vst.msk [vmem:[%s2 + $0x38] sm:$0xff] %vm272, %v271
  %v281 = vld [vmem:[%s3] sm:$0xff]
  %v282 = vld [vmem:[%s3 + $0x8] sm:$0xff]
  %v283 = vld [vmem:[%s3 + $0x10] sm:$0xff]
  %v284 = vld [vmem:[%s3 + $0x18] sm:$0xff]
  %v285 = vld [vmem:[%s3 + $0x20] sm:$0xff]
  %v286 = vld [vmem:[%s3 + $0x28] sm:$0xff]
  %v287 = vld [vmem:[%s3 + $0x30] sm:$0xff]
  %v288 = vld [vmem:[%s3 + $0x38] sm:$0xff]
  %v289 = vmul.f32 %v210, %v210
  %v290 = vmul.f32 %v213, %v213
  %v291 = vmul.f32 %v218, %v218
  %v292 = vmul.f32 %v221, %v221
  %v293 = vmul.f32 %v226, %v226
  %v294 = vmul.f32 %v229, %v229
  %v295 = vmul.f32 %v234, %v234
  %v296 = vmul.f32 %v237, %v237
  %297 = vadd.xlane.f32.xlu0 %v289
  %v298 = vpop.xlane.xlu0 %297
  %299 = vadd.xlane.f32.xlu0 %v290
  %v300 = vpop.xlane.xlu0 %299
  %301 = vadd.xlane.f32.xlu0 %v291
  %v302 = vpop.xlane.xlu0 %301
  %303 = vadd.xlane.f32.xlu0 %v292
  %v304 = vpop.xlane.xlu0 %303
  %305 = vadd.xlane.f32.xlu0 %v293
  %v306 = vpop.xlane.xlu0 %305
  %307 = vadd.xlane.f32.xlu0 %v294
  %v308 = vpop.xlane.xlu0 %307
  %309 = vadd.xlane.f32.xlu0 %v295
  %v310 = vpop.xlane.xlu0 %309
  %311 = vadd.xlane.f32.xlu0 %v296
  %v312 = vpop.xlane.xlu0 %311
  %v313 = vadd.f32 %v281, %v298
  %v314 = vadd.f32 %v282, %v300
  %v315 = vadd.f32 %v283, %v302
  %v316 = vadd.f32 %v284, %v304
  %v317 = vadd.f32 %v285, %v306
  %v318 = vadd.f32 %v286, %v308
  %v319 = vadd.f32 %v287, %v310
  %v320 = vadd.f32 %v288, %v312
  %321 = vst.msk [vmem:[%s3] sm:$0xff] %vm272, %v313
  %322 = vst.msk [vmem:[%s3 + $0x8] sm:$0xff] %vm272, %v314
  %323 = vst.msk [vmem:[%s3 + $0x10] sm:$0xff] %vm272, %v315
  %324 = vst.msk [vmem:[%s3 + $0x18] sm:$0xff] %vm272, %v316
  %325 = vst.msk [vmem:[%s3 + $0x20] sm:$0xff] %vm272, %v317
  %326 = vst.msk [vmem:[%s3 + $0x28] sm:$0xff] %vm272, %v318
  %327 = vst.msk [vmem:[%s3 + $0x30] sm:$0xff] %vm272, %v319
  %328 = vst.msk [vmem:[%s3 + $0x38] sm:$0xff] %vm272, %v320
  // Predicated region
  $region14: #{firstlayer_forward.2} parent=0 // pred_check
    _
  $region15: #{firstlayer_forward.2} parent=0 // pred_check_branch
    %330 = sbr.rel (0) target = $region17
  $region16: #{firstlayer_forward.2} parent=0 // pred_region
    _
  $region17: #{firstlayer_forward.2} parent=0 // pred_fallthru
    _
  // Predicated region
  $region18: #{firstlayer_forward.2} parent=0 // pred_check
    _
  $region19: #{firstlayer_forward.2} parent=0 // pred_check_branch
    %332 = sbr.rel (0) target = $region21
  $region20: #{firstlayer_forward.2} parent=0 // pred_region
    _
  $region21: #{firstlayer_forward.2} parent=0 // pred_fallthru
    _
  // Predicated region
  $region22: #{firstlayer_forward.2} parent=0 // pred_check
    _
  $region23: #{firstlayer_forward.2} parent=0 // pred_check_branch
    %334 = sbr.rel (0) target = $region25
  $region24: #{firstlayer_forward.2} parent=0 // pred_region
    _
  $region25: #{firstlayer_forward.2} parent=0 // pred_fallthru
    _
  // Predicated region
  $region26: #{firstlayer_forward.2} parent=0 // pred_check
    _
  $region27: #{firstlayer_forward.2} parent=0 // pred_check_branch
    %336 = sbr.rel (0) target = $region29
  $region28: #{firstlayer_forward.2} parent=0 // pred_region
    _
  $region29: #{firstlayer_forward.2} parent=0 // pred_fallthru
    _

</llo_original>
